<compile_context>
chip_gen: v6e
topology: v6e:2x2x1
jax: 0.10.0
libtpu: 0.0.40
codegen_flags: <defaults>
</compile_context>

<pallas_src>
import functools

import jax
import jax.numpy as jnp
from jax.experimental import pallas as pl
from jax.experimental.pallas import tpu as pltpu


def _cls_head_kernel(x_ref, w_ref, b_ref, o_ref, acc_ref, *, inv_hw, nc, tc):
    # x_ref:   (TB, TC, THW) activation tile (native dtype)
    # w_ref:   (C, Npad)     weight.T, zero-padded along classes (native dtype)
    # b_ref:   (1, Npad)     bias, zero-padded (native dtype)
    # o_ref:   (TB, Npad)    output tile (f32 by default)
    # acc_ref: (nc, TB, TC)  f32 running spatial sums (persist across grid steps)
    c_step = pl.program_id(1)
    hw_step = pl.program_id(2)
    last_hw = pl.num_programs(2) - 1

    # Partial spatial sum of this tile.  dtype=f32 asks for f32 accumulation in
    # the reduce itself (no materialized f32 copy of the whole tile).
    part = jnp.sum(x_ref[...], axis=-1, dtype=jnp.float32)          # (TB, TC)

    @pl.when(hw_step == 0)
    def _():
        acc_ref[c_step] = part

    @pl.when(hw_step != 0)
    def _():
        acc_ref[c_step] = acc_ref[c_step] + part

    @pl.when((c_step == nc - 1) & (hw_step == last_hw))
    def _():
        out = b_ref[...].astype(jnp.float32)                        # (1, Npad)
        for c in range(nc):                                         # static loop
            pooled = acc_ref[c] * inv_hw                            # (TB, TC) mean, f32
            out = out + jnp.dot(pooled.astype(w_ref.dtype),         # keep w native dtype
                                w_ref[c * tc:(c + 1) * tc, :],
                                preferred_element_type=jnp.float32)
        o_ref[...] = out.astype(o_ref.dtype)


def _divisors_desc(n):
    return [d for d in range(n, 0, -1) if n % d == 0]


def _vmem_limit_bytes():
    try:
        phys = int(pltpu.get_tpu_info().vmem_capacity_bytes)
    except Exception:
        phys = 64 << 20  # conservative (v7x-sized) fallback
    # ~64 MiB on 128 MiB parts (v5e/v6e), ~46 MiB on v7x's 64 MiB, never < 32 MiB.
    return max(32 << 20, min(64 << 20, (phys * 72) // 100))


def _pick_tiles(B, C, HW, x_bytes, out_bytes, n_pad, budget_bytes):
    """Pick (tb, tc, thw).  Priorities: (1) keep thw == HW (contiguous DMA
    rows), (2) keep all block dims lane/sublane-legal, (3) >= 2 batch tiles
    when legal (megacore on v7x), (4) biggest tile that fits the budget."""

    def cost(tb, tc, thw):
        return (2 * tb * tc * thw * x_bytes        # double-buffered x tile
                + 2 * tb * n_pad * out_bytes       # double-buffered output tile
                + tb * C * 4)                      # f32 accumulator scratch

    # Legal batch tiles (sublane-legal for the (tb, Npad) output block).
    tb_cands = [d for d in _divisors_desc(B) if d % 8 == 0 or d == B]
    multi = [d for d in tb_cands if B // d >= 2]       # >= 2 B-tiles preferred
    ordered_tb = multi + [d for d in tb_cands if d not in multi]

    # 1) Full C, full HW; shrink tb only.
    for tb in ordered_tb:
        if cost(tb, C, HW) <= budget_bytes:
            return tb, C, HW
    tb_min = tb_cands[-1]

    # 2) Split the channel axis, keep thw == HW (contiguous DMA rows).
    tc_cands = [d for d in _divisors_desc(C) if d % 8 == 0 or d == C]
    for tc in tc_cands:
        if cost(tb_min, tc, HW) <= budget_bytes:
            return tb_min, tc, HW
    tc_min = tc_cands[-1]

    # 3) Split HW as a last resort (only legal when HW % 128 == 0).
    if HW % 128 == 0:
        thw_cands = [d for d in _divisors_desc(HW) if d % 128 == 0]
        for thw in thw_cands:
            if cost(tb_min, tc_min, thw) <= budget_bytes:
                return tb_min, tc_min, thw
        return tb_min, tc_min, thw_cands[-1]

    # 4) HW not 128-divisible: full-HW blocks are the only legal option.
    return tb_min, tc_min, HW


def classification_head(x_nchw, weight, bias, *, out_dtype=jnp.float32,
                        tb=None, tc=None, thw=None):
    """x_nchw: (B, C, H, W); weight: (num_classes, C) [PyTorch nn.Linear layout];
    bias: (num_classes,).  Returns (B, num_classes) logits in `out_dtype`."""
    B, C, H, W = x_nchw.shape
    num_classes = weight.shape[0]
    HW = H * W
    n_pad = ((num_classes + 127) // 128) * 128       # lane-dense class dim

    x_bytes = jnp.dtype(x_nchw.dtype).itemsize
    w_bytes = jnp.dtype(weight.dtype).itemsize
    b_bytes = jnp.dtype(bias.dtype).itemsize
    out_bytes = jnp.dtype(out_dtype).itemsize

    vmem_limit = _vmem_limit_bytes()
    fixed = 2 * C * n_pad * w_bytes + 2 * n_pad * b_bytes   # double-buffered constants
    budget = max(1 << 20, vmem_limit - fixed - (4 << 20))   # 4 MiB headroom

    a_tb, a_tc, a_thw = _pick_tiles(B, C, HW, x_bytes, out_bytes, n_pad, budget)
    tb = a_tb if tb is None else tb
    tc = a_tc if tc is None else tc
    thw = a_thw if thw is None else thw
    assert B % tb == 0 and C % tc == 0 and HW % thw == 0, \
        "tile sizes must divide (B, C, H*W)"

    nb, nc, nhw = B // tb, C // tc, HW // thw

    # Host-side glue: flatten spatial; transpose + zero-pad weight/bias so the
    # class dim is lane-dense.  No mean folding (1/(H*W) applied in-kernel).
    x_flat = x_nchw.reshape(B, C, HW)
    w_pad = jnp.pad(weight.T, ((0, 0), (0, n_pad - num_classes)))       # (C, Npad)
    b_pad = jnp.pad(bias, (0, n_pad - num_classes)).reshape(1, n_pad)   # (1, Npad)

    kernel = functools.partial(_cls_head_kernel, inv_hw=1.0 / HW, nc=nc, tc=tc)

    out = pl.pallas_call(
        kernel,
        out_shape=jax.ShapeDtypeStruct((B, n_pad), out_dtype),
        grid_spec=pltpu.PrefetchScalarGridSpec(
            num_scalar_prefetch=0,
            grid=(nb, nc, nhw),
            in_specs=[
                pl.BlockSpec((tb, tc, thw), lambda i, c, j: (i, c, j)),
                # Constant index maps -> DMA'd once, VMEM-resident thereafter.
                # TODO(synk): single-buffer these (pipeline_mode=pl.Buffered(1))
                # to reclaim VMEM on v7x once buffer_count=1 is known-supported.
                pl.BlockSpec((C, n_pad), lambda i, c, j: (0, 0)),
                pl.BlockSpec((1, n_pad), lambda i, c, j: (0, 0)),
            ],
            out_specs=pl.BlockSpec((tb, n_pad), lambda i, c, j: (i, 0)),
            scratch_shapes=[pltpu.VMEM((nc, tb, tc), jnp.float32)],
        ),
        compiler_params=pltpu.CompilerParams(
            dimension_semantics=("parallel", "arbitrary", "arbitrary"),
            vmem_limit_bytes=vmem_limit,
        ),
    )(x_flat, w_pad, b_pad)

    return out[:, :num_classes]


def _reference(x_nchw, weight, bias):
    pooled = jnp.mean(x_nchw.astype(jnp.float32), axis=(2, 3))          # (B, C)
    return pooled @ weight.astype(jnp.float32).T + bias.astype(jnp.float32)


if __name__ == "__main__":
    # ClassificationHead(dim=32, num_classes=8) on a (2, 32, 16, 16) feature map.
    B, C, H, W = 2, 32, 16, 16
    num_classes = 8

    key = jax.random.PRNGKey(0)
    kx, kw, kb = jax.random.split(key, 3)

    x = jax.random.normal(kx, (B, C, H, W), dtype=jnp.float32)

    # nn.Linear(dim, num_classes)-style init: U(-1/sqrt(dim), 1/sqrt(dim))
    bound = 1.0 / (C ** 0.5)
    weight = jax.random.uniform(kw, (num_classes, C), minval=-bound, maxval=bound,
                                dtype=jnp.float32)
    bias = jax.random.uniform(kb, (num_classes,), minval=-bound, maxval=bound,
                              dtype=jnp.float32)

    ref = _reference(x, weight, bias)

    # 1) Auto-tiled path (single grid step at this size: tb=B, tc=C, thw=HW).
    out_auto = jax.block_until_ready(classification_head(x, weight, bias))
    # 2) Explicit small tiles exercise the multi-step channel- and spatial-
    #    reduction (pipelined accumulator) paths: grid = (1, 2, 2).
    out_tiled = jax.block_until_ready(
        classification_head(x, weight, bias, tb=2, tc=16, thw=128))

    for out in (out_auto, out_tiled):
        assert out.shape == (B, num_classes)
        assert out.dtype == jnp.float32
        assert jnp.allclose(out, ref, atol=1e-4, rtol=1e-4), "mismatch vs reference"

    print("KERNEL_OK")
</pallas_src>

<mosaic_0001>
module attributes {stable_mosaic.version = 11 : i64} {
  func.func @_cls_head_kernel(%arg0: i32, %arg1: i32, %arg2: i32, %arg3: memref<2x32x256xf32, #tpu.memory_space<vmem>>, %arg4: memref<32x128xf32, #tpu.memory_space<vmem>>, %arg5: memref<1x128xf32, #tpu.memory_space<vmem>>, %arg6: memref<2x128xf32, #tpu.memory_space<vmem>>, %arg7: memref<1x2x32xf32, #tpu.memory_space<vmem>>) attributes {dimension_semantics = [#tpu.dimension_semantics<parallel>, #tpu.dimension_semantics<arbitrary>, #tpu.dimension_semantics<arbitrary>], iteration_bounds = array<i64: 1, 1, 1>, scalar_prefetch = 0 : i64, scratch_operands = 1 : i64, tpu.core_type = #tpu.core_type<tc>, window_params = [{transform_indices = @transform_0, window_bounds = array<i64: 2, 32, 256>}, {pipeline_mode = #tpu.pipeline_mode<synchronous>, transform_indices = @transform_1, window_bounds = array<i64: 32, 128>}, {pipeline_mode = #tpu.pipeline_mode<synchronous>, transform_indices = @transform_2, window_bounds = array<i64: 1, 128>}, {transform_indices = @transform_3, window_bounds = array<i64: 2, 128>}]} {
    %c0 = arith.constant 0 : index
    %c0_0 = arith.constant 0 : index
    %c0_1 = arith.constant 0 : index
    %0 = vector.load %arg3[%c0, %c0_0, %c0_1] : memref<2x32x256xf32, #tpu.memory_space<vmem>>, vector<2x32x256xf32>
    %cst = arith.constant dense<0.000000e+00> : vector<2x32xf32>
    %1 = vector.multi_reduction <add>, %0, %cst [2] : vector<2x32x256xf32> to vector<2x32xf32>
    %c0_i32 = arith.constant 0 : i32
    %2 = arith.cmpi eq, %arg2, %c0_i32 : i32
    %3 = arith.extui %2 : i1 to i32
    %c0_i32_2 = arith.constant 0 : i32
    %4 = arith.cmpi ne, %3, %c0_i32_2 : i32
    scf.if %4 {
      %13 = arith.index_cast %arg1 : i32 to index
      %c0_8 = arith.constant 0 : index
      %c0_9 = arith.constant 0 : index
      %14 = vector.load %arg7[%13, %c0_8, %c0_9] : memref<1x2x32xf32, #tpu.memory_space<vmem>>, vector<1x2x32xf32>
      %15 = vector.shape_cast %14 : vector<1x2x32xf32> to vector<2x32xf32>
      %16 = vector.shape_cast %1 : vector<2x32xf32> to vector<1x2x32xf32>
      tpu.vector_store %arg7[%13, %c0_8, %c0_9], %16 {strides = array<i32>} : memref<1x2x32xf32, #tpu.memory_space<vmem>>, vector<1x2x32xf32>,
    } else {
    }
    %c0_i32_3 = arith.constant 0 : i32
    %5 = arith.cmpi ne, %arg2, %c0_i32_3 : i32
    %6 = arith.extui %5 : i1 to i32
    %c0_i32_4 = arith.constant 0 : i32
    %7 = arith.cmpi ne, %6, %c0_i32_4 : i32
    scf.if %7 {
      %13 = arith.index_cast %arg1 : i32 to index
      %c0_8 = arith.constant 0 : index
      %c0_9 = arith.constant 0 : index
      %14 = vector.load %arg7[%13, %c0_8, %c0_9] : memref<1x2x32xf32, #tpu.memory_space<vmem>>, vector<1x2x32xf32>
      %15 = vector.shape_cast %14 : vector<1x2x32xf32> to vector<2x32xf32>
      %16 = arith.addf %15, %1 : vector<2x32xf32>
      %17 = arith.index_cast %arg1 : i32 to index
      %c0_10 = arith.constant 0 : index
      %c0_11 = arith.constant 0 : index
      %18 = vector.load %arg7[%17, %c0_10, %c0_11] : memref<1x2x32xf32, #tpu.memory_space<vmem>>, vector<1x2x32xf32>
      %19 = vector.shape_cast %18 : vector<1x2x32xf32> to vector<2x32xf32>
      %20 = vector.shape_cast %16 : vector<2x32xf32> to vector<1x2x32xf32>
      tpu.vector_store %arg7[%17, %c0_10, %c0_11], %20 {strides = array<i32>} : memref<1x2x32xf32, #tpu.memory_space<vmem>>, vector<1x2x32xf32>,
    } else {
    }
    %c0_i32_5 = arith.constant 0 : i32
    %8 = arith.cmpi eq, %arg1, %c0_i32_5 : i32
    %c0_i32_6 = arith.constant 0 : i32
    %9 = arith.cmpi eq, %arg2, %c0_i32_6 : i32
    %10 = arith.andi %8, %9 : i1
    %11 = arith.extui %10 : i1 to i32
    %c0_i32_7 = arith.constant 0 : i32
    %12 = arith.cmpi ne, %11, %c0_i32_7 : i32
    scf.if %12 {
      %c0_8 = arith.constant 0 : index
      %c0_9 = arith.constant 0 : index
      %13 = vector.load %arg5[%c0_8, %c0_9] : memref<1x128xf32, #tpu.memory_space<vmem>>, vector<1x128xf32>
      %c0_10 = arith.constant 0 : index
      %c0_11 = arith.constant 0 : index
      %c0_12 = arith.constant 0 : index
      %14 = vector.load %arg7[%c0_10, %c0_11, %c0_12] : memref<1x2x32xf32, #tpu.memory_space<vmem>>, vector<1x2x32xf32>
      %15 = vector.shape_cast %14 : vector<1x2x32xf32> to vector<2x32xf32>
      %cst_13 = arith.constant 3.906250e-03 : f32
      %16 = vector.broadcast %cst_13 : f32 to vector<2x32xf32>
      %17 = arith.mulf %15, %16 : vector<2x32xf32>
      %c0_14 = arith.constant 0 : index
      %c0_15 = arith.constant 0 : index
      %18 = vector.load %arg4[%c0_14, %c0_15] : memref<32x128xf32, #tpu.memory_space<vmem>>, vector<32x128xf32>
      %cst_16 = arith.constant dense<0.000000e+00> : vector<2x128xf32>
      %19 = tpu.matmul %17, %18, %cst_16 {dimension_numbers = #tpu.dot_dimension_numbers<[1], [0], [0], [1], [0, 0, 1, 1], [], []>} : vector<2x32xf32>, vector<32x128xf32>, vector<2x128xf32> -> vector<2x128xf32>
      %20 = vector.broadcast %13 : vector<1x128xf32> to vector<2x128xf32>
      %21 = arith.addf %20, %19 : vector<2x128xf32>
      %c0_17 = arith.constant 0 : index
      %c0_18 = arith.constant 0 : index
      %22 = vector.load %arg6[%c0_17, %c0_18] : memref<2x128xf32, #tpu.memory_space<vmem>>, vector<2x128xf32>
      tpu.vector_store %arg6[%c0_17, %c0_18], %21 {strides = array<i32>} : memref<2x128xf32, #tpu.memory_space<vmem>>, vector<2x128xf32>,
    } else {
    }
    return
  }
  func.func @transform_0(%arg0: i32, %arg1: i32, %arg2: i32) -> (i32, i32, i32) {
    %c0_i32 = arith.constant 0 : i32
    return %arg0, %arg1, %arg2 : i32, i32, i32
  }
  func.func @transform_1(%arg0: i32, %arg1: i32, %arg2: i32) -> (i32, i32) {
    %c0_i32 = arith.constant 0 : i32
    %c0_i32_0 = arith.constant 0 : i32
    %c0_i32_1 = arith.constant 0 : i32
    return %c0_i32, %c0_i32_0 : i32, i32
  }
  func.func @transform_2(%arg0: i32, %arg1: i32, %arg2: i32) -> (i32, i32) {
    %c0_i32 = arith.constant 0 : i32
    %c0_i32_0 = arith.constant 0 : i32
    %c0_i32_1 = arith.constant 0 : i32
    return %c0_i32, %c0_i32_0 : i32, i32
  }
  func.func @transform_3(%arg0: i32, %arg1: i32, %arg2: i32) -> (i32, i32) {
    %c0_i32 = arith.constant 0 : i32
    %c0_i32_0 = arith.constant 0 : i32
    return %arg0, %c0_i32 : i32, i32
  }
}

</mosaic_0001>

<llo_original>
// kernel: tpu_custom_call.1
$region0: #{tpu_custom_call.1}
  #allocation0 [shape = 'u32[]', space=smem, size = 0x4, offset = 0x4, fixed_abs, tag = 'smem constant byte address 0x4 - core index']
  #allocation1 [shape = 'u32[144,128]{1,0:T(1,128)}', space=vmem, size = 0x12000, scoped, tag = 'internal scratch']
  #allocation2 [shape = 'f32[1,2,32]{2,1,0:T(2,128)}', space=vmem, size = 0x400, scoped, tag = 'scratch operand']
  %s0 = inlined_call_operand.hbm [shape: f32[2,32,256], index: 0, kind: input, shape index: {}]
  %s1 = inlined_call_operand.hbm [shape: f32[32,128], index: 1, kind: input, shape index: {}]
  %s2 = inlined_call_operand.vmem [shape: f32[1,128], index: 2, kind: input, shape index: {}]
  %s3 = inlined_call_operand.hbm [shape: f32[2,128], index: 3, kind: output, shape index: {}]
  %s4 = sld [smem:[#allocation0]]
  $region42: #{tpu_custom_call.1} parent=0
    _
  %s6 = ssub.s32 1, %s4
  %s7 = scalar_select 0, %s6, %s4
  $region1: #{tpu_custom_call.1} parent=0
    #allocation3 [shape = 'u8[65536]{0}', space=vmem, size = 0x10000, scoped, tag = 'input window, operand 0, single buffered']
    #allocation4 [shape = 's32[1]{0}', space=sflag, size = 0x4, scoped, tag = 'scoped memory for tpu_custom_call.1']
    #allocation5 [shape = 's32[1]{0}', space=sflag, size = 0x4, scoped, tag = 'scoped memory for tpu_custom_call.1']
    #allocation6 [shape = 'u8[16384]{0}', space=vmem, size = 0x4000, scoped, tag = 'input window, operand 1, single buffered']
    #allocation7 [shape = 's32[1]{0}', space=sflag, size = 0x4, scoped, tag = 'scoped memory for tpu_custom_call.1']
    #allocation8 [shape = 'u8[1024]{0}', space=vmem, size = 0x400, scoped, tag = 'output window, operand 0, single buffered']
    %8 = vsyncpa [#allocation4], 0
    %9 = vsyncpa [#allocation7], 0
    %10 = vsyncpa [#allocation5], 0
    // Predicated region
    $region2: #{tpu_custom_call.1} parent=1 // pred_check
      _
    $region3: #{tpu_custom_call.1} parent=1 // pred_check_branch
      %12 = sbr.rel (0) target = $region5
    $region4: #{tpu_custom_call.1} parent=1 // pred_region
      %s14 = ssub.s32 2048, 2048
      %15 = vsyncadd [#allocation4], %s14
      %s16 = sshll.u32 [#allocation3], 4
      %s17 = int_to_ptr.vmem [resolvable:$true] %s16
      %22 = dma.hbm_to_vmem [thread:$0]  %s0, 2048, %s17, [#allocation4], 256, 256, 16
    $region5: #{tpu_custom_call.1} parent=1 // pred_fallthru
      _
    // Predicated region
    $region6: #{tpu_custom_call.1} parent=1 // pred_check
      _
    $region7: #{tpu_custom_call.1} parent=1 // pred_check_branch
      %24 = sbr.rel (0) target = $region9
    $region8: #{tpu_custom_call.1} parent=1 // pred_region
      %s26 = ssub.s32 512, 512
      %27 = vsyncadd [#allocation7], %s26
      %s28 = sshll.u32 [#allocation6], 4
      %s29 = int_to_ptr.vmem [resolvable:$true] %s28
      %34 = dma.hbm_to_vmem [thread:$0]  %s1, 512, %s29, [#allocation7], 128, 128, 8
    $region9: #{tpu_custom_call.1} parent=1 // pred_fallthru
      _
    // Predicated region
    $region10: #{tpu_custom_call.1} parent=1 // pred_check
      _
    $region11: #{tpu_custom_call.1} parent=1 // pred_check_branch
      %36 = sbr.rel (0) target = $region13
    $region12: #{tpu_custom_call.1} parent=1 // pred_region
      _
    $region13: #{tpu_custom_call.1} parent=1 // pred_fallthru
      _
    // Predicated region
    $region14: #{tpu_custom_call.1} parent=1 // pred_check
      _
    $region15: #{tpu_custom_call.1} parent=1 // pred_check_branch
      %38 = sbr.rel (0) target = $region17
    $region16: #{tpu_custom_call.1} parent=1 // pred_region
      %39 = dma.done [#allocation4], 2048
    $region17: #{tpu_custom_call.1} parent=1 // pred_fallthru
      _
    // Predicated region
    $region18: #{tpu_custom_call.1} parent=1 // pred_check
      _
    $region19: #{tpu_custom_call.1} parent=1 // pred_check_branch
      %41 = sbr.rel (0) target = $region21
    $region20: #{tpu_custom_call.1} parent=1 // pred_region
      %42 = dma.done [#allocation7], 512
    $region21: #{tpu_custom_call.1} parent=1 // pred_fallthru
      _
    %v43 = vld [vmem:[#allocation3] sm:$0xff]
    %v44 = vld [vmem:[#allocation3 + $0x8] sm:$0xff]
    %v45 = vld [vmem:[#allocation3 + $0x10] sm:$0xff]
    %v46 = vld [vmem:[#allocation3 + $0x18] sm:$0xff]
    %v47 = vld [vmem:[#allocation3 + $0x20] sm:$0xff]
    %v48 = vld [vmem:[#allocation3 + $0x28] sm:$0xff]
    %v49 = vld [vmem:[#allocation3 + $0x30] sm:$0xff]
    %v50 = vld [vmem:[#allocation3 + $0x38] sm:$0xff]
    %v51 = vld [vmem:[#allocation3 + $0x40] sm:$0xff]
    %v52 = vld [vmem:[#allocation3 + $0x48] sm:$0xff]
    %v53 = vld [vmem:[#allocation3 + $0x50] sm:$0xff]
    %v54 = vld [vmem:[#allocation3 + $0x58] sm:$0xff]
    %v55 = vld [vmem:[#allocation3 + $0x60] sm:$0xff]
    %v56 = vld [vmem:[#allocation3 + $0x68] sm:$0xff]
    %v57 = vld [vmem:[#allocation3 + $0x70] sm:$0xff]
    %v58 = vld [vmem:[#allocation3 + $0x78] sm:$0xff]
    %v59 = vadd.f32 %v43, %v44
    %60 = vadd.xlane.f32.xlu0 %v59
    %v61 = vpop.xlane.xlu0 %60
    %v62 = vadd.f32 %v45, %v46
    %63 = vadd.xlane.f32.xlu0 %v62
    %v64 = vpop.xlane.xlu0 %63
    %v65 = vadd.f32 %v47, %v48
    %66 = vadd.xlane.f32.xlu0 %v65
    %v67 = vpop.xlane.xlu0 %66
    %v68 = vadd.f32 %v49, %v50
    %69 = vadd.xlane.f32.xlu0 %v68
    %v70 = vpop.xlane.xlu0 %69
    %v71 = vadd.f32 %v51, %v52
    %72 = vadd.xlane.f32.xlu0 %v71
    %v73 = vpop.xlane.xlu0 %72
    %v74 = vadd.f32 %v53, %v54
    %75 = vadd.xlane.f32.xlu0 %v74
    %v76 = vpop.xlane.xlu0 %75
    %v77 = vadd.f32 %v55, %v56
    %78 = vadd.xlane.f32.xlu0 %v77
    %v79 = vpop.xlane.xlu0 %78
    %v80 = vadd.f32 %v57, %v58
    %81 = vadd.xlane.f32.xlu0 %v80
    %v82 = vpop.xlane.xlu0 %81
    %p83 = scmp.eq.s32.totalorder 0, 0
    // Predicated region
    $region22: #{tpu_custom_call.1} parent=1 // pred_check
      %p84 = pneg %p83
    $region23: #{tpu_custom_call.1} parent=1 // pred_check_branch
      %86 = sbr.rel (%p84) target = $region25
    $region24: #{tpu_custom_call.1} parent=1 // pred_region
      %v95 = vlaneseq
      %v96 = vand.u32 %v95, 127
      %v97 = vlaneseq
      %v98 = vshrl.u32 %v97, 7
      %v99 = vsub.s32 %v96, %v98
      %v100 = vrot.slane %v61, %v99
      %v101 = vadd.s32 %v96, 4294967288
      %v102 = vlaneseq
      %v103 = vshrl.u32 %v102, 7
      %v104 = vsub.s32 %v101, %v103
      %v105 = vrot.slane %v64, %v104
      %vm106 = vcmask 130112
      %v107 = vsel %vm106, %v105, %v100
      %v108 = vadd.s32 %v96, 4294967280
      %v109 = vlaneseq
      %v110 = vshrl.u32 %v109, 7
      %v111 = vsub.s32 %v108, %v110
      %v112 = vrot.slane %v67, %v111
      %vm113 = vcmask 195712
      %v114 = vsel %vm113, %v112, %v107
      %v115 = vadd.s32 %v96, 4294967272
      %v116 = vlaneseq
      %v117 = vshrl.u32 %v116, 7
      %v118 = vsub.s32 %v115, %v117
      %v119 = vrot.slane %v70, %v118
      %vm120 = vcmask 261312
      %v121 = vsel %vm120, %v119, %v114
      %v122 = vlaneseq
      %v123 = vshrl.u32 %v122, 7
      %v124 = vsub.s32 %v96, %v123
      %v125 = vrot.slane %v73, %v124
      %v126 = vlaneseq
      %v127 = vshrl.u32 %v126, 7
      %v128 = vsub.s32 %v101, %v127
      %v129 = vrot.slane %v76, %v128
      %v130 = vsel %vm106, %v129, %v125
      %v131 = vlaneseq
      %v132 = vshrl.u32 %v131, 7
      %v133 = vsub.s32 %v108, %v132
      %v134 = vrot.slane %v79, %v133
      %v135 = vsel %vm113, %v134, %v130
      %v136 = vlaneseq
      %v137 = vshrl.u32 %v136, 7
      %v138 = vsub.s32 %v115, %v137
      %v139 = vrot.slane %v82, %v138
      %v140 = vsel %vm120, %v139, %v135
      %vm141 = vcmask 1041409
      %v142 = vsel %vm141, %v140, %v121
      %s144 = smul.u32 0, 2
      %s145 = scalar_lea.vmem [#allocation2], %s144
      %vm146 = vcmask 254976
      %147 = vst.msk [vmem:[%s145] sm:$0x3] %vm146, %v142
    $region25: #{tpu_custom_call.1} parent=1 // pred_fallthru
      _
    %p148 = scmp.ne.s32.totalorder 0, 0
    // Predicated region
    $region26: #{tpu_custom_call.1} parent=1 // pred_check
      %p149 = pneg %p148
    $region27: #{tpu_custom_call.1} parent=1 // pred_check_branch
      %151 = sbr.rel (%p149) target = $region29
    $region28: #{tpu_custom_call.1} parent=1 // pred_region
      %s152 = smul.u32 0, 2
      %s153 = scalar_lea.vmem [#allocation2], %s152
      %v154 = vld [vmem:[%s153] sm:$0x3]
      %v163 = vlaneseq
      %v164 = vand.u32 %v163, 127
      %v165 = vlaneseq
      %v166 = vshrl.u32 %v165, 7
      %v167 = vsub.s32 %v164, %v166
      %v168 = vrot.slane %v61, %v167
      %v169 = vadd.s32 %v164, 4294967288
      %v170 = vlaneseq
      %v171 = vshrl.u32 %v170, 7
      %v172 = vsub.s32 %v169, %v171
      %v173 = vrot.slane %v64, %v172
      %vm174 = vcmask 130112
      %v175 = vsel %vm174, %v173, %v168
      %v176 = vadd.s32 %v164, 4294967280
      %v177 = vlaneseq
      %v178 = vshrl.u32 %v177, 7
      %v179 = vsub.s32 %v176, %v178
      %v180 = vrot.slane %v67, %v179
      %vm181 = vcmask 195712
      %v182 = vsel %vm181, %v180, %v175
      %v183 = vadd.s32 %v164, 4294967272
      %v184 = vlaneseq
      %v185 = vshrl.u32 %v184, 7
      %v186 = vsub.s32 %v183, %v185
      %v187 = vrot.slane %v70, %v186
      %vm188 = vcmask 261312
      %v189 = vsel %vm188, %v187, %v182
      %v190 = vlaneseq
      %v191 = vshrl.u32 %v190, 7
      %v192 = vsub.s32 %v164, %v191
      %v193 = vrot.slane %v73, %v192
      %v194 = vlaneseq
      %v195 = vshrl.u32 %v194, 7
      %v196 = vsub.s32 %v169, %v195
      %v197 = vrot.slane %v76, %v196
      %v198 = vsel %vm174, %v197, %v193
      %v199 = vlaneseq
      %v200 = vshrl.u32 %v199, 7
      %v201 = vsub.s32 %v176, %v200
      %v202 = vrot.slane %v79, %v201
      %v203 = vsel %vm181, %v202, %v198
      %v204 = vlaneseq
      %v205 = vshrl.u32 %v204, 7
      %v206 = vsub.s32 %v183, %v205
      %v207 = vrot.slane %v82, %v206
      %v208 = vsel %vm188, %v207, %v203
      %vm209 = vcmask 1041409
      %v210 = vsel %vm209, %v208, %v189
      %v212 = vadd.f32 %v154, %v210
      %vm213 = vcmask 254976
      %214 = vst.msk [vmem:[%s153] sm:$0x3] %vm213, %v212
    $region29: #{tpu_custom_call.1} parent=1 // pred_fallthru
      _
    %p215 = scmp.eq.s32.totalorder 0, 0
    %p216 = pnand %p215, %p83
    %p217 = pneg %p216
    // Predicated region
    $region30: #{tpu_custom_call.1} parent=1 // pred_check
      _
    $region31: #{tpu_custom_call.1} parent=1 // pred_check_branch
      %219 = sbr.rel (%p216) target = $region33
    $region32: #{tpu_custom_call.1} parent=1 // pred_region
      %v220 = vld [vmem:[%s2] sm:$0x1]
      %v221 = vld [vmem:[#allocation2] sm:$0x3]
      %v222 = vmul.f32 %v221, 0.00390625
      %v223 = vld [vmem:[#allocation6] sm:$0xff]
      %v224 = vld [vmem:[#allocation6 + $0x8] sm:$0xff]
      %v225 = vld [vmem:[#allocation6 + $0x10] sm:$0xff]
      %v226 = vld [vmem:[#allocation6 + $0x18] sm:$0xff]
      %vm227 = vcmask 261120
      %v229 = vsel %vm227, %v222, 0
      %231 = vmatprep.subr.mxu0 0.0
      %232 = vmatpush1.msra.mxu0 0.0
      %233 = vmatprep.subr.mxu0 0.0
      %234 = vmatpush1.msra.mxu0 0.0
      %235 = vmatprep.subr.mxu0 0.0
      %236 = vmatpush1.msra.mxu0 0.0
      %237 = vmatprep.subr.mxu0 0.0
      %238 = vmatpush1.msra.mxu0 0.0
      %239 = vmatprep.subr.mxu0 0.0
      %240 = vmatpush1.msra.mxu0 0.0
      %241 = vmatprep.subr.mxu0 0.0
      %242 = vmatpush1.msra.mxu0 0.0
      %243 = vmatprep.subr.mxu0 0.0
      %244 = vmatpush1.msra.mxu0 0.0
      %245 = vmatprep.subr.mxu0 0.0
      %246 = vmatpush1.msra.mxu0 0.0
      %247 = vmatprep.subr.mxu0 0.0
      %248 = vmatpush1.msra.mxu0 0.0
      %249 = vmatprep.subr.mxu0 0.0
      %250 = vmatpush1.msra.mxu0 0.0
      %251 = vmatprep.subr.mxu0 0.0
      %252 = vmatpush1.msra.mxu0 0.0
      %253 = vmatprep.subr.mxu0 0.0
      %254 = vmatpush1.msra.mxu0 0.0
      %255 = vmatprep.subr.mxu0 0.0
      %256 = vmatpush1.msra.mxu0 %v226
      %257 = vmatprep.subr.mxu0 0.0
      %258 = vmatpush1.msra.mxu0 %v225
      %259 = vmatprep.subr.mxu0 0.0
      %260 = vmatpush1.msra.mxu0 %v224
      %261 = vmatprep.subr.mxu0 0.0
      %262 = vmatpush1.msra.mxu0 %v223
      %263 = vmatprep.subr.mxu0 0.0
      %264 = vmatpush2.msra.mxu0 0.0
      %265 = vmatprep.subr.mxu0 0.0
      %266 = vmatpush2.msra.mxu0 0.0
      %267 = vmatprep.subr.mxu0 0.0
      %268 = vmatpush2.msra.mxu0 0.0
      %269 = vmatprep.subr.mxu0 0.0
      %270 = vmatpush2.msra.mxu0 0.0
      %271 = vmatprep.subr.mxu0 0.0
      %272 = vmatpush2.msra.mxu0 0.0
      %273 = vmatprep.subr.mxu0 0.0
      %274 = vmatpush2.msra.mxu0 0.0
      %275 = vmatprep.subr.mxu0 0.0
      %276 = vmatpush2.msra.mxu0 0.0
      %277 = vmatprep.subr.mxu0 0.0
      %278 = vmatpush2.msra.mxu0 0.0
      %279 = vmatprep.subr.mxu0 0.0
      %280 = vmatpush2.msra.mxu0 0.0
      %281 = vmatprep.subr.mxu0 0.0
      %282 = vmatpush2.msra.mxu0 0.0
      %283 = vmatprep.subr.mxu0 0.0
      %284 = vmatpush2.msra.mxu0 0.0
      %285 = vmatprep.subr.mxu0 0.0
      %286 = vmatpush2.msra.mxu0 0.0
      %287 = vmatprep.subr.mxu0 0.0
      %288 = vmatpush2.msra.mxu0 0.0
      %289 = vmatprep.subr.mxu0 0.0
      %290 = vmatpush2.msra.mxu0 0.0
      %291 = vmatprep.subr.mxu0 0.0
      %292 = vmatpush2.msra.mxu0 0.0
      %293 = vmatprep.subr.mxu0 0.0
      %294 = vmatpush2.msra.mxu0 0.0
      %295 = vmatprep.mubr.f32.mxu0 0.0
      %296 = vmatmul.mubr.f32.gmra.mxu0 %v229
      %v297 = vpop.f32.mrf.mxu0
      %v298 = vadd.f32 0.0, %v297
      %v299 = vpop.f32.mrf.mxu0
      %300 = vdwg.mxu0
      %v302 = vlaneseq
      %v303 = vshrl.u32 %v302, 7
      %v304 = vsub.s32 0, %v303
      %v305 = vrot.slane %v220, %v304
      %v307 = vadd.f32 %v305, %v298
      %308 = vst [vmem:[#allocation8] sm:$0x3] %v307
    $region33: #{tpu_custom_call.1} parent=1 // pred_fallthru
      _
    // Predicated region
    $region34: #{tpu_custom_call.1} parent=1 // pred_check
      _
    $region35: #{tpu_custom_call.1} parent=1 // pred_check_branch
      %310 = sbr.rel (0) target = $region37
    $region36: #{tpu_custom_call.1} parent=1 // pred_region
      %s312 = ssub.s32 32, 32
      %313 = vsyncadd [#allocation5], %s312
      %s315 = sshll.u32 [#allocation8], 4
      %s316 = int_to_ptr.vmem [resolvable:$true] %s315
      %318 = dma.vmem_to_hbm [thread:$0]  %s316, 32, %s3, [#allocation5]
    $region37: #{tpu_custom_call.1} parent=1 // pred_fallthru
      _
    // Predicated region
    $region38: #{tpu_custom_call.1} parent=1 // pred_check
      _
    $region39: #{tpu_custom_call.1} parent=1 // pred_check_branch
      %320 = sbr.rel (0) target = $region41
    $region40: #{tpu_custom_call.1} parent=1 // pred_region
      %321 = dma.done [#allocation5], 32
    $region41: #{tpu_custom_call.1} parent=1 // pred_fallthru
      _
    %322 = vsyncpa [#allocation4], 1
    %323 = vsyncpa [#allocation7], 1
    %324 = vsyncpa [#allocation5], 1

</llo_original>
